<compile_context>
chip_gen: v7x
topology: tpu7x:2x2x1
jax: 0.10.0
libtpu: 0.0.40
codegen_flags: <defaults>
</compile_context>

<pallas_src>
import jax
import jax.numpy as jnp
from jax.experimental import pallas as pl
from jax.experimental.pallas import tpu as pltpu


def _round_up(x, m):
    return (x + m - 1) // m * m


# ----------------------------------------------------------------------------- #
# Kernel: batch tile -> lane-dense (TM, A_pad) slab [adv | val | zeros]
# All matmul inputs bf16, accumulation f32, bias/ReLU in f32.
# ----------------------------------------------------------------------------- #
def dnn_body_kernel(x_ref,
                    w1_ref, b1_ref,
                    w2_ref, b2_ref,
                    wav_ref, bav_ref,
                    whead_ref, bhead_ref,
                    out_ref):
    relu = lambda t: jnp.maximum(t, 0.0)
    bf16 = jnp.bfloat16

    x = x_ref[...]                                                        # (TM, S) bf16

    h = relu(jnp.dot(x, w1_ref[...],
                     preferred_element_type=jnp.float32) + b1_ref[...])   # (TM, 512) f32
    h = relu(jnp.dot(h.astype(bf16), w2_ref[...],
                     preferred_element_type=jnp.float32) + b2_ref[...])   # (TM, 256) f32

    # Fused adv1|val1 head: one MXU push -> (TM, 320) = [a | v]
    av = relu(jnp.dot(h.astype(bf16), wav_ref[...],
                      preferred_element_type=jnp.float32) + bav_ref[...])

    # Fused adv2|val2 head: rows 0:256 carry Wa2 (cols 0:A), rows 256:320 carry Wv2
    # (column val_col); output is directly the lane-dense [adv | val | zeros] slab.
    out_ref[...] = relu(jnp.dot(av.astype(bf16), whead_ref[...],
                                preferred_element_type=jnp.float32) + bhead_ref[...])


# ----------------------------------------------------------------------------- #
# One-time weight packing (hoisted out of the forward hot path)
# ----------------------------------------------------------------------------- #
def pack_params(params):
    bf16 = jnp.bfloat16
    A = params["wa2"].shape[1]
    A_pad = _round_up(A + 1, 128)          # adv columns + 1 val column, lane-dense
    val_col = A
    k_adv = params["wa1"].shape[1]         # 256
    k_val = params["wv1"].shape[1]         # 64
    k_head = k_adv + k_val                 # 320

    # Fused adv1|val1 weight/bias.
    w_av = jnp.concatenate([params["wa1"], params["wv1"]], axis=1).astype(bf16)  # (256, 320)
    b_av = jnp.concatenate([params["ba1"], params["bv1"]], axis=1)               # (1, 320)

    # Fused adv2|val2 head producing the lane-dense slab.
    w_head = jnp.zeros((k_head, A_pad), jnp.float32)
    w_head = w_head.at[:k_adv, :A].set(params["wa2"])
    w_head = w_head.at[k_adv:, val_col].set(params["wv2"][:, 0])
    w_head = w_head.astype(bf16)                                                  # (320, A_pad)
    b_head = jnp.zeros((1, A_pad), jnp.float32)
    b_head = b_head.at[:, :A].set(params["ba2"])
    b_head = b_head.at[:, val_col].set(params["bv2"][:, 0])                       # (1, A_pad)

    return dict(
        w1=params["w1"].astype(bf16), b1=params["b1"],
        w2=params["w2"].astype(bf16), b2=params["b2"],
        w_av=w_av, b_av=b_av,
        w_head=w_head, b_head=b_head,
        action_dim=A, a_pad=A_pad, val_col=val_col,
    )


# ----------------------------------------------------------------------------- #
# Forward
# ----------------------------------------------------------------------------- #
def dnn_forward(state, packed):
    """state: (B, state_dim) f32.  packed: output of pack_params()."""
    B, state_dim = state.shape
    A = packed["action_dim"]
    A_pad = packed["a_pad"]
    val_col = packed["val_col"]
    bf16 = jnp.bfloat16

    # --- batch tiling ---
    # small B: single tile; mid B: aim for 2 grid steps (both v7x TensorCores);
    # very large B: 1024-row tiles to amortize per-step pipeline overhead.
    if B <= 16:
        TM = _round_up(B, 8)
    elif B >= 2048:
        TM = 1024
    else:
        TM = max(8, _round_up(pl.cdiv(B, 2), 8))
    Bp = _round_up(B, TM)

    x = state.astype(bf16)
    if Bp != B:
        x = jnp.pad(x, ((0, Bp - B), (0, 0)))

    w1, b1 = packed["w1"], packed["b1"]
    w2, b2 = packed["w2"], packed["b2"]
    w_av, b_av = packed["w_av"], packed["b_av"]
    w_head, b_head = packed["w_head"], packed["b_head"]

    const2 = lambda i: (0, 0)
    in_specs = [
        pl.BlockSpec((TM, state_dim), lambda i: (i, 0)),    # state tile
        pl.BlockSpec(w1.shape, const2), pl.BlockSpec(b1.shape, const2),
        pl.BlockSpec(w2.shape, const2), pl.BlockSpec(b2.shape, const2),
        pl.BlockSpec(w_av.shape, const2), pl.BlockSpec(b_av.shape, const2),
        pl.BlockSpec(w_head.shape, const2), pl.BlockSpec(b_head.shape, const2),
    ]
    out_specs = pl.BlockSpec((TM, A_pad), lambda i: (i, 0))

    flops = 2 * Bp * (state_dim * 512 + 512 * 256 + 256 * 320 + 320 * A_pad)
    weight_bytes = sum(int(w.size) * w.dtype.itemsize
                       for w in (w1, b1, w2, b2, w_av, b_av, w_head, b_head))
    bytes_accessed = int(x.size) * 2 + weight_bytes + Bp * A_pad * 4
    cost = pl.CostEstimate(flops=flops, transcendentals=0,
                           bytes_accessed=bytes_accessed)

    slab = pl.pallas_call(
        dnn_body_kernel,
        out_shape=jax.ShapeDtypeStruct((Bp, A_pad), jnp.float32),
        grid=(Bp // TM,),
        in_specs=in_specs,
        out_specs=out_specs,
        compiler_params=pltpu.CompilerParams(
            dimension_semantics=("parallel",)),
        cost_estimate=cost,
    )(x, w1, b1, w2, b2, w_av, b_av, w_head, b_head)

    # Strip batch/lane padding; dueling combine in plain JAX (global adv.mean()).
    adv = slab[:B, :A]
    val = slab[:B, val_col:val_col + 1]
    return val + (adv - jnp.mean(adv))


# ----------------------------------------------------------------------------- #
# Params + reference
# ----------------------------------------------------------------------------- #
def init_params(key, state_dim, action_dim):
    """Deterministic init mimicking nn.Linear default (uniform +/- 1/sqrt(fan_in))."""
    def linear(key, fan_in, fan_out):
        kw, kb = jax.random.split(key)
        bound = 1.0 / (fan_in ** 0.5)
        w = jax.random.uniform(kw, (fan_in, fan_out), jnp.float32, -bound, bound)
        b = jax.random.uniform(kb, (1, fan_out), jnp.float32, -bound, bound)
        return w, b

    keys = jax.random.split(key, 6)
    w1, b1 = linear(keys[0], state_dim, 512)
    w2, b2 = linear(keys[1], 512, 256)
    wa1, ba1 = linear(keys[2], 256, 256)
    wa2, ba2 = linear(keys[3], 256, action_dim)
    wv1, bv1 = linear(keys[4], 256, 64)
    wv2, bv2 = linear(keys[5], 64, 1)
    return dict(w1=w1, b1=b1, w2=w2, b2=b2,
                wa1=wa1, ba1=ba1, wa2=wa2, ba2=ba2,
                wv1=wv1, bv1=bv1, wv2=wv2, bv2=bv2)


def dnn_reference_bf16(state, p):
    """Pure-JAX reference matching kernel numerics (bf16 matmul inputs, f32 accum)."""
    relu = lambda t: jnp.maximum(t, 0.0)
    bf = lambda t: t.astype(jnp.bfloat16)
    dot = lambda a, b: jnp.dot(bf(a), bf(b), preferred_element_type=jnp.float32)
    h = relu(dot(state, p["w1"]) + p["b1"])
    h = relu(dot(h, p["w2"]) + p["b2"])
    a = relu(dot(h, p["wa1"]) + p["ba1"])
    v = relu(dot(h, p["wv1"]) + p["bv1"])
    adv = relu(dot(a, p["wa2"]) + p["ba2"])
    val = relu(dot(v, p["wv2"]) + p["bv2"])
    return val + (adv - jnp.mean(adv))


if __name__ == "__main__":
    key = jax.random.PRNGKey(0)
    k_state, k_params, k_state2 = jax.random.split(key, 3)

    batch, state_dim, action_dim = 8, 32, 8
    state = jax.random.normal(k_state, (batch, state_dim), jnp.float32)
    params = init_params(k_params, state_dim, action_dim)
    packed = jax.tree_util.tree_map(
        lambda x: x, pack_params(params))   # packed once, reused for every forward

    # small batch (single grid step)
    q = jax.block_until_ready(dnn_forward(state, packed))
    q_ref = dnn_reference_bf16(state, params)
    assert q.shape == (batch, action_dim)
    assert jnp.allclose(q, q_ref, atol=1e-3, rtol=1e-3), "mismatch vs reference (B=8)"

    # larger batch exercising the 2-step batch-tiled grid + padding path
    batch2 = 300
    state2 = jax.random.normal(k_state2, (batch2, state_dim), jnp.float32)
    q2 = jax.block_until_ready(dnn_forward(state2, packed))
    q2_ref = dnn_reference_bf16(state2, params)
    assert q2.shape == (batch2, action_dim)
    assert jnp.allclose(q2, q2_ref, atol=1e-3, rtol=1e-3), "mismatch vs reference (B=300)"

    print("KERNEL_OK")
</pallas_src>

<mosaic_0001>
module attributes {stable_mosaic.version = 11 : i64} {
  func.func @dnn_body_kernel(%arg0: i32, %arg1: memref<8x32xbf16, #tpu.memory_space<vmem>>, %arg2: memref<32x512xbf16, #tpu.memory_space<vmem>>, %arg3: memref<1x512xf32, #tpu.memory_space<vmem>>, %arg4: memref<512x256xbf16, #tpu.memory_space<vmem>>, %arg5: memref<1x256xf32, #tpu.memory_space<vmem>>, %arg6: memref<256x320xbf16, #tpu.memory_space<vmem>>, %arg7: memref<1x320xf32, #tpu.memory_space<vmem>>, %arg8: memref<320x128xbf16, #tpu.memory_space<vmem>>, %arg9: memref<1x128xf32, #tpu.memory_space<vmem>>, %arg10: memref<8x128xf32, #tpu.memory_space<vmem>>) attributes {dimension_semantics = [#tpu.dimension_semantics<parallel>], iteration_bounds = array<i64: 1>, scalar_prefetch = 0 : i64, scratch_operands = 0 : i64, tpu.core_type = #tpu.core_type<tc>, window_params = [{transform_indices = @transform_0, window_bounds = array<i64: 8, 32>}, {pipeline_mode = #tpu.pipeline_mode<synchronous>, transform_indices = @transform_1, window_bounds = array<i64: 32, 512>}, {pipeline_mode = #tpu.pipeline_mode<synchronous>, transform_indices = @transform_2, window_bounds = array<i64: 1, 512>}, {pipeline_mode = #tpu.pipeline_mode<synchronous>, transform_indices = @transform_3, window_bounds = array<i64: 512, 256>}, {pipeline_mode = #tpu.pipeline_mode<synchronous>, transform_indices = @transform_4, window_bounds = array<i64: 1, 256>}, {pipeline_mode = #tpu.pipeline_mode<synchronous>, transform_indices = @transform_5, window_bounds = array<i64: 256, 320>}, {pipeline_mode = #tpu.pipeline_mode<synchronous>, transform_indices = @transform_6, window_bounds = array<i64: 1, 320>}, {pipeline_mode = #tpu.pipeline_mode<synchronous>, transform_indices = @transform_7, window_bounds = array<i64: 320, 128>}, {pipeline_mode = #tpu.pipeline_mode<synchronous>, transform_indices = @transform_8, window_bounds = array<i64: 1, 128>}, {transform_indices = @transform_9, window_bounds = array<i64: 8, 128>}]} {
    %c0 = arith.constant 0 : index
    %c0_0 = arith.constant 0 : index
    %0 = vector.load %arg1[%c0, %c0_0] : memref<8x32xbf16, #tpu.memory_space<vmem>>, vector<8x32xbf16>
    %c0_1 = arith.constant 0 : index
    %c0_2 = arith.constant 0 : index
    %1 = vector.load %arg2[%c0_1, %c0_2] : memref<32x512xbf16, #tpu.memory_space<vmem>>, vector<32x512xbf16>
    %cst = arith.constant dense<0.000000e+00> : vector<8x512xf32>
    %2 = tpu.matmul %0, %1, %cst {dimension_numbers = #tpu.dot_dimension_numbers<[1], [0], [0], [1], [0, 0, 1, 1], [], []>} : vector<8x32xbf16>, vector<32x512xbf16>, vector<8x512xf32> -> vector<8x512xf32>
    %c0_3 = arith.constant 0 : index
    %c0_4 = arith.constant 0 : index
    %3 = vector.load %arg3[%c0_3, %c0_4] : memref<1x512xf32, #tpu.memory_space<vmem>>, vector<1x512xf32>
    %4 = vector.broadcast %3 : vector<1x512xf32> to vector<8x512xf32>
    %5 = arith.addf %2, %4 : vector<8x512xf32>
    %cst_5 = arith.constant 0.000000e+00 : f32
    %6 = vector.broadcast %cst_5 : f32 to vector<8x512xf32>
    %7 = arith.maximumf %5, %6 : vector<8x512xf32>
    %8 = arith.truncf %7 : vector<8x512xf32> to vector<8x512xbf16>
    %c0_6 = arith.constant 0 : index
    %c0_7 = arith.constant 0 : index
    %9 = vector.load %arg4[%c0_6, %c0_7] : memref<512x256xbf16, #tpu.memory_space<vmem>>, vector<512x256xbf16>
    %cst_8 = arith.constant dense<0.000000e+00> : vector<8x256xf32>
    %10 = tpu.matmul %8, %9, %cst_8 {dimension_numbers = #tpu.dot_dimension_numbers<[1], [0], [0], [1], [0, 0, 1, 1], [], []>} : vector<8x512xbf16>, vector<512x256xbf16>, vector<8x256xf32> -> vector<8x256xf32>
    %c0_9 = arith.constant 0 : index
    %c0_10 = arith.constant 0 : index
    %11 = vector.load %arg5[%c0_9, %c0_10] : memref<1x256xf32, #tpu.memory_space<vmem>>, vector<1x256xf32>
    %12 = vector.broadcast %11 : vector<1x256xf32> to vector<8x256xf32>
    %13 = arith.addf %10, %12 : vector<8x256xf32>
    %cst_11 = arith.constant 0.000000e+00 : f32
    %14 = vector.broadcast %cst_11 : f32 to vector<8x256xf32>
    %15 = arith.maximumf %13, %14 : vector<8x256xf32>
    %16 = arith.truncf %15 : vector<8x256xf32> to vector<8x256xbf16>
    %c0_12 = arith.constant 0 : index
    %c0_13 = arith.constant 0 : index
    %17 = vector.load %arg6[%c0_12, %c0_13] : memref<256x320xbf16, #tpu.memory_space<vmem>>, vector<256x320xbf16>
    %cst_14 = arith.constant dense<0.000000e+00> : vector<8x320xf32>
    %18 = tpu.matmul %16, %17, %cst_14 {dimension_numbers = #tpu.dot_dimension_numbers<[1], [0], [0], [1], [0, 0, 1, 1], [], []>} : vector<8x256xbf16>, vector<256x320xbf16>, vector<8x320xf32> -> vector<8x320xf32>
    %c0_15 = arith.constant 0 : index
    %c0_16 = arith.constant 0 : index
    %19 = vector.load %arg7[%c0_15, %c0_16] : memref<1x320xf32, #tpu.memory_space<vmem>>, vector<1x320xf32>
    %20 = vector.broadcast %19 : vector<1x320xf32> to vector<8x320xf32>
    %21 = arith.addf %18, %20 : vector<8x320xf32>
    %cst_17 = arith.constant 0.000000e+00 : f32
    %22 = vector.broadcast %cst_17 : f32 to vector<8x320xf32>
    %23 = arith.maximumf %21, %22 : vector<8x320xf32>
    %24 = arith.truncf %23 : vector<8x320xf32> to vector<8x320xbf16>
    %c0_18 = arith.constant 0 : index
    %c0_19 = arith.constant 0 : index
    %25 = vector.load %arg8[%c0_18, %c0_19] : memref<320x128xbf16, #tpu.memory_space<vmem>>, vector<320x128xbf16>
    %cst_20 = arith.constant dense<0.000000e+00> : vector<8x128xf32>
    %26 = tpu.matmul %24, %25, %cst_20 {dimension_numbers = #tpu.dot_dimension_numbers<[1], [0], [0], [1], [0, 0, 1, 1], [], []>} : vector<8x320xbf16>, vector<320x128xbf16>, vector<8x128xf32> -> vector<8x128xf32>
    %c0_21 = arith.constant 0 : index
    %c0_22 = arith.constant 0 : index
    %27 = vector.load %arg9[%c0_21, %c0_22] : memref<1x128xf32, #tpu.memory_space<vmem>>, vector<1x128xf32>
    %28 = vector.broadcast %27 : vector<1x128xf32> to vector<8x128xf32>
    %29 = arith.addf %26, %28 : vector<8x128xf32>
    %cst_23 = arith.constant 0.000000e+00 : f32
    %30 = vector.broadcast %cst_23 : f32 to vector<8x128xf32>
    %31 = arith.maximumf %29, %30 : vector<8x128xf32>
    %c0_24 = arith.constant 0 : index
    %c0_25 = arith.constant 0 : index
    %32 = vector.load %arg10[%c0_24, %c0_25] : memref<8x128xf32, #tpu.memory_space<vmem>>, vector<8x128xf32>
    tpu.vector_store %arg10[%c0_24, %c0_25], %31 {strides = array<i32>} : memref<8x128xf32, #tpu.memory_space<vmem>>, vector<8x128xf32>,
    return
  }
  func.func @transform_0(%arg0: i32) -> (i32, i32) {
    %c0_i32 = arith.constant 0 : i32
    %c0_i32_0 = arith.constant 0 : i32
    return %arg0, %c0_i32 : i32, i32
  }
  func.func @transform_1(%arg0: i32) -> (i32, i32) {
    %c0_i32 = arith.constant 0 : i32
    %c0_i32_0 = arith.constant 0 : i32
    %c0_i32_1 = arith.constant 0 : i32
    return %c0_i32, %c0_i32_0 : i32, i32
  }
  func.func @transform_2(%arg0: i32) -> (i32, i32) {
    %c0_i32 = arith.constant 0 : i32
    %c0_i32_0 = arith.constant 0 : i32
    %c0_i32_1 = arith.constant 0 : i32
    return %c0_i32, %c0_i32_0 : i32, i32
  }
  func.func @transform_3(%arg0: i32) -> (i32, i32) {
    %c0_i32 = arith.constant 0 : i32
    %c0_i32_0 = arith.constant 0 : i32
    %c0_i32_1 = arith.constant 0 : i32
    return %c0_i32, %c0_i32_0 : i32, i32
  }
  func.func @transform_4(%arg0: i32) -> (i32, i32) {
    %c0_i32 = arith.constant 0 : i32
    %c0_i32_0 = arith.constant 0 : i32
    %c0_i32_1 = arith.constant 0 : i32
    return %c0_i32, %c0_i32_0 : i32, i32
  }
  func.func @transform_5(%arg0: i32) -> (i32, i32) {
    %c0_i32 = arith.constant 0 : i32
    %c0_i32_0 = arith.constant 0 : i32
    %c0_i32_1 = arith.constant 0 : i32
    return %c0_i32, %c0_i32_0 : i32, i32
  }
  func.func @transform_6(%arg0: i32) -> (i32, i32) {
    %c0_i32 = arith.constant 0 : i32
    %c0_i32_0 = arith.constant 0 : i32
    %c0_i32_1 = arith.constant 0 : i32
    return %c0_i32, %c0_i32_0 : i32, i32
  }
  func.func @transform_7(%arg0: i32) -> (i32, i32) {
    %c0_i32 = arith.constant 0 : i32
    %c0_i32_0 = arith.constant 0 : i32
    %c0_i32_1 = arith.constant 0 : i32
    return %c0_i32, %c0_i32_0 : i32, i32
  }
  func.func @transform_8(%arg0: i32) -> (i32, i32) {
    %c0_i32 = arith.constant 0 : i32
    %c0_i32_0 = arith.constant 0 : i32
    %c0_i32_1 = arith.constant 0 : i32
    return %c0_i32, %c0_i32_0 : i32, i32
  }
  func.func @transform_9(%arg0: i32) -> (i32, i32) {
    %c0_i32 = arith.constant 0 : i32
    %c0_i32_0 = arith.constant 0 : i32
    return %arg0, %c0_i32 : i32, i32
  }
}

</mosaic_0001>

<llo_original>
// kernel: tpu_custom_call.1
$region0: #{tpu_custom_call.1}
  #allocation0 [shape = 'u32[]', space=smem, size = 0x4, offset = 0x4, fixed_abs, tag = 'smem constant byte address 0x4 - core index']
  #allocation1 [shape = 'u32[144,128]{1,0:T(1,128)}', space=vmem, size = 0x12000, scoped, tag = 'internal scratch']
  %s0 = inlined_call_operand.vmem [shape: bf16[8,32], index: 0, kind: input, shape index: {}]
  %s1 = inlined_call_operand.hbm [shape: bf16[32,512], index: 1, kind: input, shape index: {}]
  %s2 = inlined_call_operand.vmem [shape: f32[1,512], index: 2, kind: input, shape index: {}]
  %s3 = inlined_call_operand.vmem [shape: bf16[512,256], index: 3, kind: input, shape index: {}]
  %s4 = inlined_call_operand.vmem [shape: f32[1,256], index: 4, kind: input, shape index: {}]
  %s5 = inlined_call_operand.vmem [shape: bf16[256,320], index: 5, kind: input, shape index: {}]
  %s6 = inlined_call_operand.vmem [shape: f32[1,320], index: 6, kind: input, shape index: {}]
  %s7 = inlined_call_operand.vmem [shape: bf16[320,128], index: 7, kind: input, shape index: {}]
  %s8 = inlined_call_operand.vmem [shape: f32[1,128], index: 8, kind: input, shape index: {}]
  %s9 = inlined_call_operand.hbm [shape: f32[8,128], index: 9, kind: output, shape index: {}]
  %s10 = sld [smem:[#allocation0]]
  $region50: #{tpu_custom_call.1} parent=0
    _
  %s12 = ssub.s32 1, %s10
  %s13 = scalar_select 0, %s12, %s10
  $region1: #{tpu_custom_call.1} parent=0
    #allocation2 [shape = 'u8[32768]{0}', space=vmem, size = 0x8000, scoped, tag = 'input window, operand 1, single buffered']
    #allocation3 [shape = 's32[1]{0}', space=sflag, size = 0x4, scoped, tag = 'scoped memory for tpu_custom_call.1']
    #allocation4 [shape = 's32[1]{0}', space=sflag, size = 0x4, scoped, tag = 'scoped memory for tpu_custom_call.1']
    #allocation5 [shape = 'u8[4096]{0}', space=vmem, size = 0x1000, scoped, tag = 'output window, operand 0, single buffered']
    %14 = vsyncpa [#allocation3], 0
    %15 = vsyncpa [#allocation4], 0
    // Predicated region
    $region2: #{tpu_custom_call.1} parent=1 // pred_check
      _
    $region3: #{tpu_custom_call.1} parent=1 // pred_check_branch
      %17 = sbr.rel (0) target = $region5
    $region4: #{tpu_custom_call.1} parent=1 // pred_region
      _
    $region5: #{tpu_custom_call.1} parent=1 // pred_fallthru
      _
    // Predicated region
    $region6: #{tpu_custom_call.1} parent=1 // pred_check
      _
    $region7: #{tpu_custom_call.1} parent=1 // pred_check_branch
      %19 = sbr.rel (0) target = $region9
    $region8: #{tpu_custom_call.1} parent=1 // pred_region
      %s21 = ssub.s32 1024, 1024
      %22 = vsyncadd [#allocation3], %s21
      %s23 = sshll.u32 [#allocation2], 4
      %s24 = int_to_ptr.vmem [resolvable:$true] %s23
      %29 = dma.hbm_to_vmem [thread:$0]  %s1, 1024, %s24, [#allocation3], 256, 256, 16
    $region9: #{tpu_custom_call.1} parent=1 // pred_fallthru
      _
    // Predicated region
    $region10: #{tpu_custom_call.1} parent=1 // pred_check
      _
    $region11: #{tpu_custom_call.1} parent=1 // pred_check_branch
      %31 = sbr.rel (0) target = $region13
    $region12: #{tpu_custom_call.1} parent=1 // pred_region
      _
    $region13: #{tpu_custom_call.1} parent=1 // pred_fallthru
      _
    // Predicated region
    $region14: #{tpu_custom_call.1} parent=1 // pred_check
      _
    $region15: #{tpu_custom_call.1} parent=1 // pred_check_branch
      %33 = sbr.rel (0) target = $region17
    $region16: #{tpu_custom_call.1} parent=1 // pred_region
      _
    $region17: #{tpu_custom_call.1} parent=1 // pred_fallthru
      _
    // Predicated region
    $region18: #{tpu_custom_call.1} parent=1 // pred_check
      _
    $region19: #{tpu_custom_call.1} parent=1 // pred_check_branch
      %35 = sbr.rel (0) target = $region21
    $region20: #{tpu_custom_call.1} parent=1 // pred_region
      _
    $region21: #{tpu_custom_call.1} parent=1 // pred_fallthru
      _
    // Predicated region
    $region22: #{tpu_custom_call.1} parent=1 // pred_check
      _
    $region23: #{tpu_custom_call.1} parent=1 // pred_check_branch
      %37 = sbr.rel (0) target = $region25
    $region24: #{tpu_custom_call.1} parent=1 // pred_region
      _
    $region25: #{tpu_custom_call.1} parent=1 // pred_fallthru
      _
    // Predicated region
    $region26: #{tpu_custom_call.1} parent=1 // pred_check
      _
    $region27: #{tpu_custom_call.1} parent=1 // pred_check_branch
      %39 = sbr.rel (0) target = $region29
    $region28: #{tpu_custom_call.1} parent=1 // pred_region
      _
    $region29: #{tpu_custom_call.1} parent=1 // pred_fallthru
      _
    // Predicated region
    $region30: #{tpu_custom_call.1} parent=1 // pred_check
      _
    $region31: #{tpu_custom_call.1} parent=1 // pred_check_branch
      %41 = sbr.rel (0) target = $region33
    $region32: #{tpu_custom_call.1} parent=1 // pred_region
      _
    $region33: #{tpu_custom_call.1} parent=1 // pred_fallthru
      _
    // Predicated region
    $region34: #{tpu_custom_call.1} parent=1 // pred_check
      _
    $region35: #{tpu_custom_call.1} parent=1 // pred_check_branch
      %43 = sbr.rel (0) target = $region37
    $region36: #{tpu_custom_call.1} parent=1 // pred_region
      _
    $region37: #{tpu_custom_call.1} parent=1 // pred_fallthru
      _
    // Predicated region
    $region38: #{tpu_custom_call.1} parent=1 // pred_check
      _
    $region39: #{tpu_custom_call.1} parent=1 // pred_check_branch
      %45 = sbr.rel (0) target = $region41
    $region40: #{tpu_custom_call.1} parent=1 // pred_region
      %46 = dma.done [#allocation3], 1024
    $region41: #{tpu_custom_call.1} parent=1 // pred_fallthru
      _
    %v48 = vld [vmem:[%s0] sm:$0xf]
    %v49 = vld [vmem:[#allocation2] sm:$0xff]
    %v50 = vld [vmem:[#allocation2 + $0x8] sm:$0xff]
    %v51 = vld [vmem:[#allocation2 + $0x10] sm:$0xff]
    %v52 = vld [vmem:[#allocation2 + $0x18] sm:$0xff]
    %v53 = vld [vmem:[#allocation2 + $0x20] sm:$0xff]
    %v54 = vld [vmem:[#allocation2 + $0x28] sm:$0xff]
    %v55 = vld [vmem:[#allocation2 + $0x30] sm:$0xff]
    %v56 = vld [vmem:[#allocation2 + $0x38] sm:$0xff]
    %v57 = vld [vmem:[%s2] sm:$0xf]
    %v59 = vlaneseq
    %v60 = vshrl.u32 %v59, 7
    %v61 = vsub.s32 0, %v60
    %v62 = vrot.slane %v57, %v61
    %v63 = vlaneseq
    %v64 = vshrl.u32 %v63, 7
    %v65 = vsub.s32 1, %v64
    %v66 = vrot.slane %v57, %v65
    %v67 = vlaneseq
    %v68 = vshrl.u32 %v67, 7
    %v69 = vsub.s32 2, %v68
    %v70 = vrot.slane %v57, %v69
    %v71 = vlaneseq
    %v72 = vshrl.u32 %v71, 7
    %v73 = vsub.s32 3, %v72
    %v74 = vrot.slane %v57, %v73
    %v87 = vunpack.c.l.b16 %v49
    %v88 = vunpack.c.h.b16 %v49
    %v89 = vunpack.c.l.b16 %v50
    %v90 = vunpack.c.h.b16 %v50
    %v91 = vunpack.c.l.b16 %v51
    %v92 = vunpack.c.h.b16 %v51
    %v93 = vunpack.c.l.b16 %v52
    %v94 = vunpack.c.h.b16 %v52
    %v95 = vunpack.c.l.b16 %v53
    %v96 = vunpack.c.h.b16 %v53
    %v97 = vunpack.c.l.b16 %v54
    %v98 = vunpack.c.h.b16 %v54
    %v99 = vunpack.c.l.b16 %v55
    %v100 = vunpack.c.h.b16 %v55
    %v101 = vunpack.c.l.b16 %v56
    %v102 = vunpack.c.h.b16 %v56
    %v103 = vpack.c.b16 %v91, %v87
    %v104 = vpack.c.b16 %v92, %v88
    %v105 = vpack.c.b16 %v93, %v89
    %v106 = vpack.c.b16 %v94, %v90
    %v107 = vpack.c.b16 %v99, %v95
    %v108 = vpack.c.b16 %v100, %v96
    %v109 = vpack.c.b16 %v101, %v97
    %v110 = vpack.c.b16 %v102, %v98
    %vm119 = vcmask 261120
    %v121 = vsel %vm119, %v48, 0
    %123 = vmatprep.subr.bf16.mxu0 %v104
    %124 = vmatpush1.bf16.msra.mxu0 %v103
    %125 = vmatprep.subr.bf16.mxu0 %v108
    %126 = vmatpush1.bf16.msra.mxu0 %v107
    %127 = vmatprep.subr.bf16.mxu0 0
    %128 = vmatpush1.bf16.msra.mxu0 0
    %129 = vmatprep.subr.bf16.mxu0 0
    %130 = vmatpush1.bf16.msra.mxu0 0
    %131 = vmatprep.subr.bf16.mxu0 0
    %132 = vmatpush1.bf16.msra.mxu0 0
    %133 = vmatprep.subr.bf16.mxu0 0
    %134 = vmatpush1.bf16.msra.mxu0 0
    %135 = vmatprep.subr.bf16.mxu0 0
    %136 = vmatpush1.bf16.msra.mxu0 0
    %137 = vmatprep.subr.bf16.mxu0 0
    %138 = vmatpush1.bf16.msra.mxu0 0
    %139 = vmatprep.subr.bf16.mxu0 0
    %140 = vmatpush1.bf16.msra.mxu0 0
    %141 = vmatprep.subr.bf16.mxu0 0
    %142 = vmatpush1.bf16.msra.mxu0 0
    %143 = vmatprep.subr.bf16.mxu0 0
    %144 = vmatpush1.bf16.msra.mxu0 0
    %145 = vmatprep.subr.bf16.mxu0 0
    %146 = vmatpush1.bf16.msra.mxu0 0
    %147 = vmatprep.subr.bf16.mxu0 0
    %148 = vmatpush1.bf16.msra.mxu0 0
    %149 = vmatprep.subr.bf16.mxu0 0
    %150 = vmatpush1.bf16.msra.mxu0 0
    %151 = vmatprep.subr.bf16.mxu0 0
    %152 = vmatpush1.bf16.msra.mxu0 0
    %153 = vmatprep.subr.bf16.mxu0 0
    %154 = vmatpush1.bf16.msra.mxu0 0
    %155 = vmatprep.mubr.bf16.mxu0 0
    %156 = vmatmul.mubr.bf16.gmra.mrb[0].mxu0 %v121
    %v157 = vpop.f32.mrb[0].mxu0
    %v158 = vadd.f32 %v62, %v157
    %v159 = vpop.f32.mrb[0].mxu0
    %v160 = vadd.f32 %v66, %v159
    %v161 = vpop.f32.mrb[0].mxu0
    %v162 = vpop.f32.mrb[0].mxu0
    %163 = vdwg.mxu0
    %164 = vmatprep.subr.bf16.mxu0 %v106
    %165 = vmatpush1.bf16.msra.mxu0 %v105
    %166 = vmatprep.subr.bf16.mxu0 %v110
    %167 = vmatpush1.bf16.msra.mxu0 %v109
    %168 = vmatprep.subr.bf16.mxu0 0
    %169 = vmatpush1.bf16.msra.mxu0 0
    %170 = vmatprep.subr.bf16.mxu0 0
    %171 = vmatpush1.bf16.msra.mxu0 0
    %172 = vmatprep.subr.bf16.mxu0 0
    %173 = vmatpush1.bf16.msra.mxu0 0
    %174 = vmatprep.subr.bf16.mxu0 0
    %175 = vmatpush1.bf16.msra.mxu0 0
    %176 = vmatprep.subr.bf16.mxu0 0
    %177 = vmatpush1.bf16.msra.mxu0 0
    %178 = vmatprep.subr.bf16.mxu0 0
    %179 = vmatpush1.bf16.msra.mxu0 0
    %180 = vmatprep.subr.bf16.mxu0 0
    %181 = vmatpush1.bf16.msra.mxu0 0
    %182 = vmatprep.subr.bf16.mxu0 0
    %183 = vmatpush1.bf16.msra.mxu0 0
    %184 = vmatprep.subr.bf16.mxu0 0
    %185 = vmatpush1.bf16.msra.mxu0 0
    %186 = vmatprep.subr.bf16.mxu0 0
    %187 = vmatpush1.bf16.msra.mxu0 0
    %188 = vmatprep.subr.bf16.mxu0 0
    %189 = vmatpush1.bf16.msra.mxu0 0
    %190 = vmatprep.subr.bf16.mxu0 0
    %191 = vmatpush1.bf16.msra.mxu0 0
    %192 = vmatprep.subr.bf16.mxu0 0
    %193 = vmatpush1.bf16.msra.mxu0 0
    %194 = vmatprep.subr.bf16.mxu0 0
    %195 = vmatpush1.bf16.msra.mxu0 0
    %196 = vmatprep.mubr.bf16.mxu0 0
    %197 = vmatmul.mubr.bf16.gmra.mrb[0].mxu0 %v121
    %v198 = vpop.f32.mrb[0].mxu0
    %v199 = vadd.f32 %v70, %v198
    %v200 = vpop.f32.mrb[0].mxu0
    %v201 = vadd.f32 %v74, %v200
    %v202 = vpop.f32.mrb[0].mxu0
    %v203 = vpop.f32.mrb[0].mxu0
    %204 = vdwg.mxu0
    %v205 = vmax.f32 %v158, 0.0
    %v206 = vmax.f32 %v160, 0.0
    %v207 = vmax.f32 %v199, 0.0
    %v208 = vmax.f32 %v201, 0.0
    %v209 = vpack.c.bf16 %v205, %v205
    %v210 = vpack.c.bf16 %v206, %v206
    %v211 = vpack.c.bf16 %v207, %v207
    %v212 = vpack.c.bf16 %v208, %v208
    %v213 = vld [vmem:[%s3] sm:$0xff]
    %v214 = vld [vmem:[%s3 + $0x8] sm:$0xff]
    %v215 = vld [vmem:[%s3 + $0x10] sm:$0xff]
    %v216 = vld [vmem:[%s3 + $0x18] sm:$0xff]
    %v217 = vld [vmem:[%s3 + $0x20] sm:$0xff]
    %v218 = vld [vmem:[%s3 + $0x28] sm:$0xff]
    %v219 = vld [vmem:[%s3 + $0x30] sm:$0xff]
    %v220 = vld [vmem:[%s3 + $0x38] sm:$0xff]
    %v221 = vld [vmem:[%s3 + $0x40] sm:$0xff]
    %v222 = vld [vmem:[%s3 + $0x48] sm:$0xff]
    %v223 = vld [vmem:[%s3 + $0x50] sm:$0xff]
    %v224 = vld [vmem:[%s3 + $0x58] sm:$0xff]
    %v225 = vld [vmem:[%s3 + $0x60] sm:$0xff]
    %v226 = vld [vmem:[%s3 + $0x68] sm:$0xff]
    %v227 = vld [vmem:[%s3 + $0x70] sm:$0xff]
    %v228 = vld [vmem:[%s3 + $0x78] sm:$0xff]
    %v229 = vld [vmem:[%s3 + $0x80] sm:$0xff]
    %v230 = vld [vmem:[%s3 + $0x88] sm:$0xff]
    %v231 = vld [vmem:[%s3 + $0x90] sm:$0xff]
    %v232 = vld [vmem:[%s3 + $0x98] sm:$0xff]
    %v233 = vld [vmem:[%s3 + $0xa0] sm:$0xff]
    %v234 = vld [vmem:[%s3 + $0xa8] sm:$0xff]
    %v235 = vld [vmem:[%s3 + $0xb0] sm:$0xff]
    %v236 = vld [vmem:[%s3 + $0xb8] sm:$0xff]
    %v237 = vld [vmem:[%s3 + $0xc0] sm:$0xff]
    %v238 = vld [vmem:[%s3 + $0xc8] sm:$0xff]
    %v239 = vld [vmem:[%s3 + $0xd0] sm:$0xff]
    %v240 = vld [vmem:[%s3 + $0xd8] sm:$0xff]
    %v241 = vld [vmem:[%s3 + $0xe0] sm:$0xff]
    %v242 = vld [vmem:[%s3 + $0xe8] sm:$0xff]
    %v243 = vld [vmem:[%s3 + $0xf0] sm:$0xff]
    %v244 = vld [vmem:[%s3 + $0xf8] sm:$0xff]
    %v245 = vld [vmem:[%s3 + $0x100] sm:$0xff]
    %v246 = vld [vmem:[%s3 + $0x108] sm:$0xff]
    %v247 = vld [vmem:[%s3 + $0x110] sm:$0xff]
    %v248 = vld [vmem:[%s3 + $0x118] sm:$0xff]
    %v249 = vld [vmem:[%s3 + $0x120] sm:$0xff]
    %v250 = vld [vmem:[%s3 + $0x128] sm:$0xff]
    %v251 = vld [vmem:[%s3 + $0x130] sm:$0xff]
    %v252 = vld [vmem:[%s3 + $0x138] sm:$0xff]
    %v253 = vld [vmem:[%s3 + $0x140] sm:$0xff]
    %v254 = vld [vmem:[%s3 + $0x148] sm:$0xff]
    %v255 = vld [vmem:[%s3 + $0x150] sm:$0xff]
    %v256 = vld [vmem:[%s3 + $0x158] sm:$0xff]
    %v257 = vld [vmem:[%s3 + $0x160] sm:$0xff]
    %v258 = vld [vmem:[%s3 + $0x168] sm:$0xff]
    %v259 = vld [vmem:[%s3 + $0x170] sm:$0xff]
    %v260 = vld [vmem:[%s3 + $0x178] sm:$0xff]
    %v261 = vld [vmem:[%s3 + $0x180] sm:$0xff]
    %v262 = vld [vmem:[%s3 + $0x188] sm:$0xff]
    %v263 = vld [vmem:[%s3 + $0x190] sm:$0xff]
    %v264 = vld [vmem:[%s3 + $0x198] sm:$0xff]
    %v265 = vld [vmem:[%s3 + $0x1a0] sm:$0xff]
    %v266 = vld [vmem:[%s3 + $0x1a8] sm:$0xff]
    %v267 = vld [vmem:[%s3 + $0x1b0] sm:$0xff]
    %v268 = vld [vmem:[%s3 + $0x1b8] sm:$0xff]
    %v269 = vld [vmem:[%s3 + $0x1c0] sm:$0xff]
    %v270 = vld [vmem:[%s3 + $0x1c8] sm:$0xff]
    %v271 = vld [vmem:[%s3 + $0x1d0] sm:$0xff]
    %v272 = vld [vmem:[%s3 + $0x1d8] sm:$0xff]
    %v273 = vld [vmem:[%s3 + $0x1e0] sm:$0xff]
    %v274 = vld [vmem:[%s3 + $0x1e8] sm:$0xff]
    %v275 = vld [vmem:[%s3 + $0x1f0] sm:$0xff]
    %v276 = vld [vmem:[%s3 + $0x1f8] sm:$0xff]
    %v277 = vld [vmem:[%s4] sm:$0x3]
    %v279 = vlaneseq
    %v280 = vshrl.u32 %v279, 7
    %v281 = vsub.s32 0, %v280
    %v282 = vrot.slane %v277, %v281
    %v283 = vlaneseq
    %v284 = vshrl.u32 %v283, 7
    %v285 = vsub.s32 1, %v284
    %v286 = vrot.slane %v277, %v285
    %v353 = vunpack.c.l.b16 %v213
    %v354 = vunpack.c.h.b16 %v213
    %v355 = vunpack.c.l.b16 %v214
    %v356 = vunpack.c.h.b16 %v214
    %v357 = vunpack.c.l.b16 %v215
    %v358 = vunpack.c.h.b16 %v215
    %v359 = vunpack.c.l.b16 %v216
    %v360 = vunpack.c.h.b16 %v216
    %v361 = vunpack.c.l.b16 %v217
    %v362 = vunpack.c.h.b16 %v217
    %v363 = vunpack.c.l.b16 %v218
    %v364 = vunpack.c.h.b16 %v218
    %v365 = vunpack.c.l.b16 %v219
    %v366 = vunpack.c.h.b16 %v219
    %v367 = vunpack.c.l.b16 %v220
    %v368 = vunpack.c.h.b16 %v220
    %v369 = vunpack.c.l.b16 %v221
    %v370 = vunpack.c.h.b16 %v221
    %v371 = vunpack.c.l.b16 %v222
    %v372 = vunpack.c.h.b16 %v222
    %v373 = vunpack.c.l.b16 %v223
    %v374 = vunpack.c.h.b16 %v223
    %v375 = vunpack.c.l.b16 %v224
    %v376 = vunpack.c.h.b16 %v224
    %v377 = vunpack.c.l.b16 %v225
    %v378 = vunpack.c.h.b16 %v225
    %v379 = vunpack.c.l.b16 %v226
    %v380 = vunpack.c.h.b16 %v226
    %v381 = vunpack.c.l.b16 %v227
    %v382 = vunpack.c.h.b16 %v227
    %v383 = vunpack.c.l.b16 %v228
    %v384 = vunpack.c.h.b16 %v228
    %v385 = vunpack.c.l.b16 %v229
    %v386 = vunpack.c.h.b16 %v229
    %v387 = vunpack.c.l.b16 %v230
    %v388 = vunpack.c.h.b16 %v230
    %v389 = vunpack.c.l.b16 %v231
    %v390 = vunpack.c.h.b16 %v231
    %v391 = vunpack.c.l.b16 %v232
    %v392 = vunpack.c.h.b16 %v232
    %v393 = vunpack.c.l.b16 %v233
    %v394 = vunpack.c.h.b16 %v233
    %v395 = vunpack.c.l.b16 %v234
    %v396 = vunpack.c.h.b16 %v234
    %v397 = vunpack.c.l.b16 %v235
    %v398 = vunpack.c.h.b16 %v235
    %v399 = vunpack.c.l.b16 %v236
    %v400 = vunpack.c.h.b16 %v236
    %v401 = vunpack.c.l.b16 %v237
    %v402 = vunpack.c.h.b16 %v237
    %v403 = vunpack.c.l.b16 %v238
    %v404 = vunpack.c.h.b16 %v238
    %v405 = vunpack.c.l.b16 %v239
    %v406 = vunpack.c.h.b16 %v239
    %v407 = vunpack.c.l.b16 %v240
    %v408 = vunpack.c.h.b16 %v240
    %v409 = vunpack.c.l.b16 %v241
    %v410 = vunpack.c.h.b16 %v241
    %v411 = vunpack.c.l.b16 %v242
    %v412 = vunpack.c.h.b16 %v242
    %v413 = vunpack.c.l.b16 %v243
    %v414 = vunpack.c.h.b16 %v243
    %v415 = vunpack.c.l.b16 %v244
    %v416 = vunpack.c.h.b16 %v244
    %v417 = vunpack.c.l.b16 %v245
    %v418 = vunpack.c.h.b16 %v245
    %v419 = vunpack.c.l.b16 %v246
    %v420 = vunpack.c.h.b16 %v246
    %v421 = vunpack.c.l.b16 %v247
    %v422 = vunpack.c.h.b16 %v247
    %v423 = vunpack.c.l.b16 %v248
    %v424 = vunpack.c.h.b16 %v248
    %v425 = vunpack.c.l.b16 %v249
    %v426 = vunpack.c.h.b16 %v249
    %v427 = vunpack.c.l.b16 %v250
    %v428 = vunpack.c.h.b16 %v250
    %v429 = vunpack.c.l.b16 %v251
    %v430 = vunpack.c.h.b16 %v251
    %v431 = vunpack.c.l.b16 %v252
    %v432 = vunpack.c.h.b16 %v252
    %v433 = vunpack.c.l.b16 %v253
    %v434 = vunpack.c.h.b16 %v253
    %v435 = vunpack.c.l.b16 %v254
    %v436 = vunpack.c.h.b16 %v254
    %v437 = vunpack.c.l.b16 %v255
    %v438 = vunpack.c.h.b16 %v255
    %v439 = vunpack.c.l.b16 %v256
    %v440 = vunpack.c.h.b16 %v256
    %v441 = vunpack.c.l.b16 %v257
    %v442 = vunpack.c.h.b16 %v257
    %v443 = vunpack.c.l.b16 %v258
    %v444 = vunpack.c.h.b16 %v258
    %v445 = vunpack.c.l.b16 %v259
    %v446 = vunpack.c.h.b16 %v259
    %v447 = vunpack.c.l.b16 %v260
    %v448 = vunpack.c.h.b16 %v260
    %v449 = vunpack.c.l.b16 %v261
    %v450 = vunpack.c.h.b16 %v261
    %v451 = vunpack.c.l.b16 %v262
    %v452 = vunpack.c.h.b16 %v262
    %v453 = vunpack.c.l.b16 %v263
    %v454 = vunpack.c.h.b16 %v263
    %v455 = vunpack.c.l.b16 %v264
    %v456 = vunpack.c.h.b16 %v264
    %v457 = vunpack.c.l.b16 %v265
    %v458 = vunpack.c.h.b16 %v265
    %v459 = vunpack.c.l.b16 %v266
    %v460 = vunpack.c.h.b16 %v266
    %v461 = vunpack.c.l.b16 %v267
    %v462 = vunpack.c.h.b16 %v267
    %v463 = vunpack.c.l.b16 %v268
    %v464 = vunpack.c.h.b16 %v268
    %v465 = vunpack.c.l.b16 %v269
    %v466 = vunpack.c.h.b16 %v269
    %v467 = vunpack.c.l.b16 %v270
    %v468 = vunpack.c.h.b16 %v270
    %v469 = vunpack.c.l.b16 %v271
    %v470 = vunpack.c.h.b16 %v271
    %v471 = vunpack.c.l.b16 %v272
    %v472 = vunpack.c.h.b16 %v272
    %v473 = vunpack.c.l.b16 %v273
    %v474 = vunpack.c.h.b16 %v273
    %v475 = vunpack.c.l.b16 %v274
    %v476 = vunpack.c.h.b16 %v274
    %v477 = vunpack.c.l.b16 %v275
    %v478 = vunpack.c.h.b16 %v275
    %v479 = vunpack.c.l.b16 %v276
    %v480 = vunpack.c.h.b16 %v276
    %v481 = vpack.c.b16 %v355, %v353
    %v482 = vpack.c.b16 %v356, %v354
    %v483 = vpack.c.b16 %v359, %v357
    %v484 = vpack.c.b16 %v360, %v358
    %v485 = vpack.c.b16 %v363, %v361
    %v486 = vpack.c.b16 %v364, %v362
    %v487 = vpack.c.b16 %v367, %v365
    %v488 = vpack.c.b16 %v368, %v366
    %v489 = vpack.c.b16 %v371, %v369
    %v490 = vpack.c.b16 %v372, %v370
    %v491 = vpack.c.b16 %v375, %v373
    %v492 = vpack.c.b16 %v376, %v374
    %v493 = vpack.c.b16 %v379, %v377
    %v494 = vpack.c.b16 %v380, %v378
    %v495 = vpack.c.b16 %v383, %v381
    %v496 = vpack.c.b16 %v384, %v382
    %v497 = vpack.c.b16 %v387, %v385
    %v498 = vpack.c.b16 %v388, %v386
    %v499 = vpack.c.b16 %v391, %v389
    %v500 = vpack.c.b16 %v392, %v390
    %v501 = vpack.c.b16 %v395, %v393
    %v502 = vpack.c.b16 %v396, %v394
    %v503 = vpack.c.b16 %v399, %v397
    %v504 = vpack.c.b16 %v400, %v398
    %v505 = vpack.c.b16 %v403, %v401
    %v506 = vpack.c.b16 %v404, %v402
    %v507 = vpack.c.b16 %v407, %v405
    %v508 = vpack.c.b16 %v408, %v406
    %v509 = vpack.c.b16 %v411, %v409
    %v510 = vpack.c.b16 %v412, %v410
    %v511 = vpack.c.b16 %v415, %v413
    %v512 = vpack.c.b16 %v416, %v414
    %v513 = vpack.c.b16 %v419, %v417
    %v514 = vpack.c.b16 %v420, %v418
    %v515 = vpack.c.b16 %v423, %v421
    %v516 = vpack.c.b16 %v424, %v422
    %v517 = vpack.c.b16 %v427, %v425
    %v518 = vpack.c.b16 %v428, %v426
    %v519 = vpack.c.b16 %v431, %v429
    %v520 = vpack.c.b16 %v432, %v430
    %v521 = vpack.c.b16 %v435, %v433
    %v522 = vpack.c.b16 %v436, %v434
    %v523 = vpack.c.b16 %v439, %v437
    %v524 = vpack.c.b16 %v440, %v438
    %v525 = vpack.c.b16 %v443, %v441
    %v526 = vpack.c.b16 %v444, %v442
    %v527 = vpack.c.b16 %v447, %v445
    %v528 = vpack.c.b16 %v448, %v446
    %v529 = vpack.c.b16 %v451, %v449
    %v530 = vpack.c.b16 %v452, %v450
    %v531 = vpack.c.b16 %v455, %v453
    %v532 = vpack.c.b16 %v456, %v454
    %v533 = vpack.c.b16 %v459, %v457
    %v534 = vpack.c.b16 %v460, %v458
    %v535 = vpack.c.b16 %v463, %v461
    %v536 = vpack.c.b16 %v464, %v462
    %v537 = vpack.c.b16 %v467, %v465
    %v538 = vpack.c.b16 %v468, %v466
    %v539 = vpack.c.b16 %v471, %v469
    %v540 = vpack.c.b16 %v472, %v470
    %v541 = vpack.c.b16 %v475, %v473
    %v542 = vpack.c.b16 %v476, %v474
    %v543 = vpack.c.b16 %v479, %v477
    %v544 = vpack.c.b16 %v480, %v478
    %609 = vmatprep.subr.bf16.mxu0 %v482
    %610 = vmatpush1.bf16.msra.mxu0 %v481
    %611 = vmatprep.subr.bf16.mxu0 %v484
    %612 = vmatpush1.bf16.msra.mxu0 %v483
    %613 = vmatprep.subr.bf16.mxu0 %v486
    %614 = vmatpush1.bf16.msra.mxu0 %v485
    %615 = vmatprep.subr.bf16.mxu0 %v488
    %616 = vmatpush1.bf16.msra.mxu0 %v487
    %617 = vmatprep.subr.bf16.mxu0 %v490
    %618 = vmatpush1.bf16.msra.mxu0 %v489
    %619 = vmatprep.subr.bf16.mxu0 %v492
    %620 = vmatpush1.bf16.msra.mxu0 %v491
    %621 = vmatprep.subr.bf16.mxu0 %v494
    %622 = vmatpush1.bf16.msra.mxu0 %v493
    %623 = vmatprep.subr.bf16.mxu0 %v496
    %624 = vmatpush1.bf16.msra.mxu0 %v495
    %625 = vmatprep.subr.bf16.mxu0 %v498
    %626 = vmatpush1.bf16.msra.mxu0 %v497
    %627 = vmatprep.subr.bf16.mxu0 %v500
    %628 = vmatpush1.bf16.msra.mxu0 %v499
    %629 = vmatprep.subr.bf16.mxu0 %v502
    %630 = vmatpush1.bf16.msra.mxu0 %v501
    %631 = vmatprep.subr.bf16.mxu0 %v504
    %632 = vmatpush1.bf16.msra.mxu0 %v503
    %633 = vmatprep.subr.bf16.mxu0 %v506
    %634 = vmatpush1.bf16.msra.mxu0 %v505
    %635 = vmatprep.subr.bf16.mxu0 %v508
    %636 = vmatpush1.bf16.msra.mxu0 %v507
    %637 = vmatprep.subr.bf16.mxu0 %v510
    %638 = vmatpush1.bf16.msra.mxu0 %v509
    %639 = vmatprep.subr.bf16.mxu0 %v512
    %640 = vmatpush1.bf16.msra.mxu0 %v511
    %641 = vmatprep.mubr.bf16.mxu0 %v210
    %642 = vmatmul.mubr.bf16.gmra.mrb[0].mxu0 %v209
    %v643 = vpop.f32.mrb[0].mxu0
    %v644 = vadd.f32 %v282, %v643
    %v645 = vpop.f32.mrb[0].mxu0
    %v646 = vadd.f32 %v286, %v645
    %v647 = vpop.f32.mrb[0].mxu0
    %v648 = vpop.f32.mrb[0].mxu0
    %649 = vdwg.mxu0
    %650 = vmatprep.subr.bf16.mxu0 %v514
    %651 = vmatpush1.bf16.msra.mxu0 %v513
    %652 = vmatprep.subr.bf16.mxu0 %v516
    %653 = vmatpush1.bf16.msra.mxu0 %v515
    %654 = vmatprep.subr.bf16.mxu0 %v518
    %655 = vmatpush1.bf16.msra.mxu0 %v517
    %656 = vmatprep.subr.bf16.mxu0 %v520
    %657 = vmatpush1.bf16.msra.mxu0 %v519
    %658 = vmatprep.subr.bf16.mxu0 %v522
    %659 = vmatpush1.bf16.msra.mxu0 %v521
    %660 = vmatprep.subr.bf16.mxu0 %v524
    %661 = vmatpush1.bf16.msra.mxu0 %v523
    %662 = vmatprep.subr.bf16.mxu0 %v526
    %663 = vmatpush1.bf16.msra.mxu0 %v525
    %664 = vmatprep.subr.bf16.mxu0 %v528
    %665 = vmatpush1.bf16.msra.mxu0 %v527
    %666 = vmatprep.subr.bf16.mxu0 %v530
    %667 = vmatpush1.bf16.msra.mxu0 %v529
    %668 = vmatprep.subr.bf16.mxu0 %v532
    %669 = vmatpush1.bf16.msra.mxu0 %v531
    %670 = vmatprep.subr.bf16.mxu0 %v534
    %671 = vmatpush1.bf16.msra.mxu0 %v533
    %672 = vmatprep.subr.bf16.mxu0 %v536
    %673 = vmatpush1.bf16.msra.mxu0 %v535
    %674 = vmatprep.subr.bf16.mxu0 %v538
    %675 = vmatpush1.bf16.msra.mxu0 %v537
    %676 = vmatprep.subr.bf16.mxu0 %v540
    %677 = vmatpush1.bf16.msra.mxu0 %v539
    %678 = vmatprep.subr.bf16.mxu0 %v542
    %679 = vmatpush1.bf16.msra.mxu0 %v541
    %680 = vmatprep.subr.bf16.mxu0 %v544
    %681 = vmatpush1.bf16.msra.mxu0 %v543
    %682 = vmatprep.mubr.bf16.mxu0 %v212
    %683 = vmatmul.mubr.bf16.gmra.mrb[0].mxu0 %v211
    %v684 = vpop.f32.mrb[0].mxu0
    %v685 = vadd.f32 %v644, %v684
    %v686 = vpop.f32.mrb[0].mxu0
    %v687 = vadd.f32 %v646, %v686
    %v688 = vpop.f32.mrb[0].mxu0
    %v689 = vpop.f32.mrb[0].mxu0
    %690 = vdwg.mxu0
    %v691 = vmax.f32 %v685, 0.0
    %v692 = vmax.f32 %v687, 0.0
    %v693 = vpack.c.bf16 %v691, %v691
    %v694 = vpack.c.bf16 %v692, %v692
    %v695 = vld [vmem:[%s5] sm:$0xff]
    %v696 = vld [vmem:[%s5 + $0x8] sm:$0xf]
    %v697 = vld [vmem:[%s5 + $0xc] sm:$0xff]
    %v698 = vld [vmem:[%s5 + $0x14] sm:$0xf]
    %v699 = vld [vmem:[%s5 + $0x18] sm:$0xff]
    %v700 = vld [vmem:[%s5 + $0x20] sm:$0xf]
    %v701 = vld [vmem:[%s5 + $0x24] sm:$0xff]
    %v702 = vld [vmem:[%s5 + $0x2c] sm:$0xf]
    %v703 = vld [vmem:[%s5 + $0x30] sm:$0xff]
    %v704 = vld [vmem:[%s5 + $0x38] sm:$0xf]
    %v705 = vld [vmem:[%s5 + $0x3c] sm:$0xff]
    %v706 = vld [vmem:[%s5 + $0x44] sm:$0xf]
    %v707 = vld [vmem:[%s5 + $0x48] sm:$0xff]
    %v708 = vld [vmem:[%s5 + $0x50] sm:$0xf]
    %v709 = vld [vmem:[%s5 + $0x54] sm:$0xff]
    %v710 = vld [vmem:[%s5 + $0x5c] sm:$0xf]
    %v711 = vld [vmem:[%s5 + $0x60] sm:$0xff]
    %v712 = vld [vmem:[%s5 + $0x68] sm:$0xf]
    %v713 = vld [vmem:[%s5 + $0x6c] sm:$0xff]
    %v714 = vld [vmem:[%s5 + $0x74] sm:$0xf]
    %v715 = vld [vmem:[%s5 + $0x78] sm:$0xff]
    %v716 = vld [vmem:[%s5 + $0x80] sm:$0xf]
    %v717 = vld [vmem:[%s5 + $0x84] sm:$0xff]
    %v718 = vld [vmem:[%s5 + $0x8c] sm:$0xf]
    %v719 = vld [vmem:[%s5 + $0x90] sm:$0xff]
    %v720 = vld [vmem:[%s5 + $0x98] sm:$0xf]
    %v721 = vld [vmem:[%s5 + $0x9c] sm:$0xff]
    %v722 = vld [vmem:[%s5 + $0xa4] sm:$0xf]
    %v723 = vld [vmem:[%s5 + $0xa8] sm:$0xff]
    %v724 = vld [vmem:[%s5 + $0xb0] sm:$0xf]
    %v725 = vld [vmem:[%s5 + $0xb4] sm:$0xff]
    %v726 = vld [vmem:[%s5 + $0xbc] sm:$0xf]
    %v727 = vld [vmem:[%s5 + $0xc0] sm:$0xff]
    %v728 = vld [vmem:[%s5 + $0xc8] sm:$0xf]
    %v729 = vld [vmem:[%s5 + $0xcc] sm:$0xff]
    %v730 = vld [vmem:[%s5 + $0xd4] sm:$0xf]
    %v731 = vld [vmem:[%s5 + $0xd8] sm:$0xff]
    %v732 = vld [vmem:[%s5 + $0xe0] sm:$0xf]
    %v733 = vld [vmem:[%s5 + $0xe4] sm:$0xff]
    %v734 = vld [vmem:[%s5 + $0xec] sm:$0xf]
    %v735 = vld [vmem:[%s5 + $0xf0] sm:$0xff]
    %v736 = vld [vmem:[%s5 + $0xf8] sm:$0xf]
    %v737 = vld [vmem:[%s5 + $0xfc] sm:$0xff]
    %v738 = vld [vmem:[%s5 + $0x104] sm:$0xf]
    %v739 = vld [vmem:[%s5 + $0x108] sm:$0xff]
    %v740 = vld [vmem:[%s5 + $0x110] sm:$0xf]
    %v741 = vld [vmem:[%s5 + $0x114] sm:$0xff]
    %v742 = vld [vmem:[%s5 + $0x11c] sm:$0xf]
    %v743 = vld [vmem:[%s5 + $0x120] sm:$0xff]
    %v744 = vld [vmem:[%s5 + $0x128] sm:$0xf]
    %v745 = vld [vmem:[%s5 + $0x12c] sm:$0xff]
    %v746 = vld [vmem:[%s5 + $0x134] sm:$0xf]
    %v747 = vld [vmem:[%s5 + $0x138] sm:$0xff]
    %v748 = vld [vmem:[%s5 + $0x140] sm:$0xf]
    %v749 = vld [vmem:[%s5 + $0x144] sm:$0xff]
    %v750 = vld [vmem:[%s5 + $0x14c] sm:$0xf]
    %v751 = vld [vmem:[%s5 + $0x150] sm:$0xff]
    %v752 = vld [vmem:[%s5 + $0x158] sm:$0xf]
    %v753 = vld [vmem:[%s5 + $0x15c] sm:$0xff]
    %v754 = vld [vmem:[%s5 + $0x164] sm:$0xf]
    %v755 = vld [vmem:[%s5 + $0x168] sm:$0xff]
    %v756 = vld [vmem:[%s5 + $0x170] sm:$0xf]
    %v757 = vld [vmem:[%s5 + $0x174] sm:$0xff]
    %v758 = vld [vmem:[%s5 + $0x17c] sm:$0xf]
    %v759 = vld [vmem:[%s6] sm:$0x7]
    %v761 = vlaneseq
    %v762 = vshrl.u32 %v761, 7
    %v763 = vsub.s32 0, %v762
    %v764 = vrot.slane %v759, %v763
    %v765 = vlaneseq
    %v766 = vshrl.u32 %v765, 7
    %v767 = vsub.s32 1, %v766
    %v768 = vrot.slane %v759, %v767
    %v769 = vlaneseq
    %v770 = vshrl.u32 %v769, 7
    %v771 = vsub.s32 2, %v770
    %v772 = vrot.slane %v759, %v771
    %v840 = vunpack.c.l.b16 %v695
    %v841 = vunpack.c.h.b16 %v695
    %v842 = vunpack.c.l.b16 %v696
    %v843 = vunpack.c.l.b16 %v697
    %v844 = vunpack.c.h.b16 %v697
    %v845 = vunpack.c.l.b16 %v698
    %v846 = vunpack.c.l.b16 %v699
    %v847 = vunpack.c.h.b16 %v699
    %v848 = vunpack.c.l.b16 %v700
    %v849 = vunpack.c.l.b16 %v701
    %v850 = vunpack.c.h.b16 %v701
    %v851 = vunpack.c.l.b16 %v702
    %v852 = vunpack.c.l.b16 %v703
    %v853 = vunpack.c.h.b16 %v703
    %v854 = vunpack.c.l.b16 %v704
    %v855 = vunpack.c.l.b16 %v705
    %v856 = vunpack.c.h.b16 %v705
    %v857 = vunpack.c.l.b16 %v706
    %v858 = vunpack.c.l.b16 %v707
    %v859 = vunpack.c.h.b16 %v707
    %v860 = vunpack.c.l.b16 %v708
    %v861 = vunpack.c.l.b16 %v709
    %v862 = vunpack.c.h.b16 %v709
    %v863 = vunpack.c.l.b16 %v710
    %v864 = vunpack.c.l.b16 %v711
    %v865 = vunpack.c.h.b16 %v711
    %v866 = vunpack.c.l.b16 %v712
    %v867 = vunpack.c.l.b16 %v713
    %v868 = vunpack.c.h.b16 %v713
    %v869 = vunpack.c.l.b16 %v714
    %v870 = vunpack.c.l.b16 %v715
    %v871 = vunpack.c.h.b16 %v715
    %v872 = vunpack.c.l.b16 %v716
    %v873 = vunpack.c.l.b16 %v717
    %v874 = vunpack.c.h.b16 %v717
    %v875 = vunpack.c.l.b16 %v718
    %v876 = vunpack.c.l.b16 %v719
    %v877 = vunpack.c.h.b16 %v719
    %v878 = vunpack.c.l.b16 %v720
    %v879 = vunpack.c.l.b16 %v721
    %v880 = vunpack.c.h.b16 %v721
    %v881 = vunpack.c.l.b16 %v722
    %v882 = vunpack.c.l.b16 %v723
    %v883 = vunpack.c.h.b16 %v723
    %v884 = vunpack.c.l.b16 %v724
    %v885 = vunpack.c.l.b16 %v725
    %v886 = vunpack.c.h.b16 %v725
    %v887 = vunpack.c.l.b16 %v726
    %v888 = vunpack.c.l.b16 %v727
    %v889 = vunpack.c.h.b16 %v727
    %v890 = vunpack.c.l.b16 %v728
    %v891 = vunpack.c.l.b16 %v729
    %v892 = vunpack.c.h.b16 %v729
    %v893 = vunpack.c.l.b16 %v730
    %v894 = vunpack.c.l.b16 %v731
    %v895 = vunpack.c.h.b16 %v731
    %v896 = vunpack.c.l.b16 %v732
    %v897 = vunpack.c.l.b16 %v733
    %v898 = vunpack.c.h.b16 %v733
    %v899 = vunpack.c.l.b16 %v734
    %v900 = vunpack.c.l.b16 %v735
    %v901 = vunpack.c.h.b16 %v735
    %v902 = vunpack.c.l.b16 %v736
    %v903 = vunpack.c.l.b16 %v737
    %v904 = vunpack.c.h.b16 %v737
    %v905 = vunpack.c.l.b16 %v738
    %v906 = vunpack.c.l.b16 %v739
    %v907 = vunpack.c.h.b16 %v739
    %v908 = vunpack.c.l.b16 %v740
    %v909 = vunpack.c.l.b16 %v741
    %v910 = vunpack.c.h.b16 %v741
    %v911 = vunpack.c.l.b16 %v742
    %v912 = vunpack.c.l.b16 %v743
    %v913 = vunpack.c.h.b16 %v743
    %v914 = vunpack.c.l.b16 %v744
    %v915 = vunpack.c.l.b16 %v745
    %v916 = vunpack.c.h.b16 %v745
    %v917 = vunpack.c.l.b16 %v746
    %v918 = vunpack.c.l.b16 %v747
    %v919 = vunpack.c.h.b16 %v747
    %v920 = vunpack.c.l.b16 %v748
    %v921 = vunpack.c.l.b16 %v749
    %v922 = vunpack.c.h.b16 %v749
    %v923 = vunpack.c.l.b16 %v750
    %v924 = vunpack.c.l.b16 %v751
    %v925 = vunpack.c.h.b16 %v751
    %v926 = vunpack.c.l.b16 %v752
    %v927 = vunpack.c.l.b16 %v753
    %v928 = vunpack.c.h.b16 %v753
    %v929 = vunpack.c.l.b16 %v754
    %v930 = vunpack.c.l.b16 %v755
    %v931 = vunpack.c.h.b16 %v755
    %v932 = vunpack.c.l.b16 %v756
    %v933 = vunpack.c.l.b16 %v757
    %v934 = vunpack.c.h.b16 %v757
    %v935 = vunpack.c.l.b16 %v758
    %v936 = vpack.c.b16 %v843, %v840
    %v937 = vpack.c.b16 %v844, %v841
    %v938 = vpack.c.b16 %v845, %v842
    %v939 = vpack.c.b16 %v849, %v846
    %v940 = vpack.c.b16 %v850, %v847
    %v941 = vpack.c.b16 %v851, %v848
    %v942 = vpack.c.b16 %v855, %v852
    %v943 = vpack.c.b16 %v856, %v853
    %v944 = vpack.c.b16 %v857, %v854
    %v945 = vpack.c.b16 %v861, %v858
    %v946 = vpack.c.b16 %v862, %v859
    %v947 = vpack.c.b16 %v863, %v860
    %v948 = vpack.c.b16 %v867, %v864
    %v949 = vpack.c.b16 %v868, %v865
    %v950 = vpack.c.b16 %v869, %v866
    %v951 = vpack.c.b16 %v873, %v870
    %v952 = vpack.c.b16 %v874, %v871
    %v953 = vpack.c.b16 %v875, %v872
    %v954 = vpack.c.b16 %v879, %v876
    %v955 = vpack.c.b16 %v880, %v877
    %v956 = vpack.c.b16 %v881, %v878
    %v957 = vpack.c.b16 %v885, %v882
    %v958 = vpack.c.b16 %v886, %v883
    %v959 = vpack.c.b16 %v887, %v884
    %v960 = vpack.c.b16 %v891, %v888
    %v961 = vpack.c.b16 %v892, %v889
    %v962 = vpack.c.b16 %v893, %v890
    %v963 = vpack.c.b16 %v897, %v894
    %v964 = vpack.c.b16 %v898, %v895
    %v965 = vpack.c.b16 %v899, %v896
    %v966 = vpack.c.b16 %v903, %v900
    %v967 = vpack.c.b16 %v904, %v901
    %v968 = vpack.c.b16 %v905, %v902
    %v969 = vpack.c.b16 %v909, %v906
    %v970 = vpack.c.b16 %v910, %v907
    %v971 = vpack.c.b16 %v911, %v908
    %v972 = vpack.c.b16 %v915, %v912
    %v973 = vpack.c.b16 %v916, %v913
    %v974 = vpack.c.b16 %v917, %v914
    %v975 = vpack.c.b16 %v921, %v918
    %v976 = vpack.c.b16 %v922, %v919
    %v977 = vpack.c.b16 %v923, %v920
    %v978 = vpack.c.b16 %v927, %v924
    %v979 = vpack.c.b16 %v928, %v925
    %v980 = vpack.c.b16 %v929, %v926
    %v981 = vpack.c.b16 %v933, %v930
    %v982 = vpack.c.b16 %v934, %v931
    %v983 = vpack.c.b16 %v935, %v932
    %1032 = vmatprep.subr.bf16.mxu0 %v937
    %1033 = vmatpush1.bf16.msra.mxu0 %v936
    %1034 = vmatprep.subr.bf16.mxu0 %v940
    %1035 = vmatpush1.bf16.msra.mxu0 %v939
    %1036 = vmatprep.subr.bf16.mxu0 %v943
    %1037 = vmatpush1.bf16.msra.mxu0 %v942
    %1038 = vmatprep.subr.bf16.mxu0 %v946
    %1039 = vmatpush1.bf16.msra.mxu0 %v945
    %1040 = vmatprep.subr.bf16.mxu0 %v949
    %1041 = vmatpush1.bf16.msra.mxu0 %v948
    %1042 = vmatprep.subr.bf16.mxu0 %v952
    %1043 = vmatpush1.bf16.msra.mxu0 %v951
    %1044 = vmatprep.subr.bf16.mxu0 %v955
    %1045 = vmatpush1.bf16.msra.mxu0 %v954
    %1046 = vmatprep.subr.bf16.mxu0 %v958
    %1047 = vmatpush1.bf16.msra.mxu0 %v957
    %1048 = vmatprep.subr.bf16.mxu0 %v961
    %1049 = vmatpush1.bf16.msra.mxu0 %v960
    %1050 = vmatprep.subr.bf16.mxu0 %v964
    %1051 = vmatpush1.bf16.msra.mxu0 %v963
    %1052 = vmatprep.subr.bf16.mxu0 %v967
    %1053 = vmatpush1.bf16.msra.mxu0 %v966
    %1054 = vmatprep.subr.bf16.mxu0 %v970
    %1055 = vmatpush1.bf16.msra.mxu0 %v969
    %1056 = vmatprep.subr.bf16.mxu0 %v973
    %1057 = vmatpush1.bf16.msra.mxu0 %v972
    %1058 = vmatprep.subr.bf16.mxu0 %v976
    %1059 = vmatpush1.bf16.msra.mxu0 %v975
    %1060 = vmatprep.subr.bf16.mxu0 %v979
    %1061 = vmatpush1.bf16.msra.mxu0 %v978
    %1062 = vmatprep.subr.bf16.mxu0 %v982
    %1063 = vmatpush1.bf16.msra.mxu0 %v981
    %1064 = vmatprep.mubr.bf16.mxu0 %v694
    %1065 = vmatmul.mubr.bf16.gmra.mrb[0].mxu0 %v693
    %v1066 = vpop.f32.mrb[0].mxu0
    %v1067 = vadd.f32 %v764, %v1066
    %v1068 = vpop.f32.mrb[0].mxu0
    %v1069 = vadd.f32 %v768, %v1068
    %v1070 = vpop.f32.mrb[0].mxu0
    %v1071 = vpop.f32.mrb[0].mxu0
    %1072 = vdwg.mxu0
    %1073 = vmatprep.subr.bf16.mxu0 0
    %1074 = vmatpush1.bf16.msra.mxu0 %v938
    %1075 = vmatprep.subr.bf16.mxu0 0
    %1076 = vmatpush1.bf16.msra.mxu0 %v941
    %1077 = vmatprep.subr.bf16.mxu0 0
    %1078 = vmatpush1.bf16.msra.mxu0 %v944
    %1079 = vmatprep.subr.bf16.mxu0 0
    %1080 = vmatpush1.bf16.msra.mxu0 %v947
    %1081 = vmatprep.subr.bf16.mxu0 0
    %1082 = vmatpush1.bf16.msra.mxu0 %v950
    %1083 = vmatprep.subr.bf16.mxu0 0
    %1084 = vmatpush1.bf16.msra.mxu0 %v953
    %1085 = vmatprep.subr.bf16.mxu0 0
    %1086 = vmatpush1.bf16.msra.mxu0 %v956
    %1087 = vmatprep.subr.bf16.mxu0 0
    %1088 = vmatpush1.bf16.msra.mxu0 %v959
    %1089 = vmatprep.subr.bf16.mxu0 0
    %1090 = vmatpush1.bf16.msra.mxu0 %v962
    %1091 = vmatprep.subr.bf16.mxu0 0
    %1092 = vmatpush1.bf16.msra.mxu0 %v965
    %1093 = vmatprep.subr.bf16.mxu0 0
    %1094 = vmatpush1.bf16.msra.mxu0 %v968
    %1095 = vmatprep.subr.bf16.mxu0 0
    %1096 = vmatpush1.bf16.msra.mxu0 %v971
    %1097 = vmatprep.subr.bf16.mxu0 0
    %1098 = vmatpush1.bf16.msra.mxu0 %v974
    %1099 = vmatprep.subr.bf16.mxu0 0
    %1100 = vmatpush1.bf16.msra.mxu0 %v977
    %1101 = vmatprep.subr.bf16.mxu0 0
    %1102 = vmatpush1.bf16.msra.mxu0 %v980
    %1103 = vmatprep.subr.bf16.mxu0 0
    %1104 = vmatpush1.bf16.msra.mxu0 %v983
    %1105 = vmatprep.mubr.bf16.mxu0 %v694
    %1106 = vmatmul.mubr.bf16.gmra.mrb[0].mxu0 %v693
    %v1107 = vpop.f32.mrb[0].mxu0
    %v1108 = vadd.f32 %v772, %v1107
    %v1109 = vpop.f32.mrb[0].mxu0
    %v1110 = vpop.f32.mrb[0].mxu0
    %v1111 = vpop.f32.mrb[0].mxu0
    %1112 = vdwg.mxu0
    %v1113 = vmax.f32 %v1067, 0.0
    %v1114 = vmax.f32 %v1069, 0.0
    %v1115 = vmax.f32 %v1108, 0.0
    %v1116 = vpack.c.bf16 %v1113, %v1113
    %v1117 = vpack.c.bf16 %v1114, %v1114
    %v1118 = vpack.c.bf16 %v1115, %v1115
    %v1119 = vld [vmem:[%s7] sm:$0xf]
    %v1120 = vld [vmem:[%s7 + $0x4] sm:$0xf]
    %v1121 = vld [vmem:[%s7 + $0x8] sm:$0xf]
    %v1122 = vld [vmem:[%s7 + $0xc] sm:$0xf]
    %v1123 = vld [vmem:[%s7 + $0x10] sm:$0xf]
    %v1124 = vld [vmem:[%s7 + $0x14] sm:$0xf]
    %v1125 = vld [vmem:[%s7 + $0x18] sm:$0xf]
    %v1126 = vld [vmem:[%s7 + $0x1c] sm:$0xf]
    %v1127 = vld [vmem:[%s7 + $0x20] sm:$0xf]
    %v1128 = vld [vmem:[%s7 + $0x24] sm:$0xf]
    %v1129 = vld [vmem:[%s7 + $0x28] sm:$0xf]
    %v1130 = vld [vmem:[%s7 + $0x2c] sm:$0xf]
    %v1131 = vld [vmem:[%s7 + $0x30] sm:$0xf]
    %v1132 = vld [vmem:[%s7 + $0x34] sm:$0xf]
    %v1133 = vld [vmem:[%s7 + $0x38] sm:$0xf]
    %v1134 = vld [vmem:[%s7 + $0x3c] sm:$0xf]
    %v1135 = vld [vmem:[%s7 + $0x40] sm:$0xf]
    %v1136 = vld [vmem:[%s7 + $0x44] sm:$0xf]
    %v1137 = vld [vmem:[%s7 + $0x48] sm:$0xf]
    %v1138 = vld [vmem:[%s7 + $0x4c] sm:$0xf]
    %v1139 = vld [vmem:[%s7 + $0x50] sm:$0xf]
    %v1140 = vld [vmem:[%s7 + $0x54] sm:$0xf]
    %v1141 = vld [vmem:[%s7 + $0x58] sm:$0xf]
    %v1142 = vld [vmem:[%s7 + $0x5c] sm:$0xf]
    %v1143 = vld [vmem:[%s7 + $0x60] sm:$0xf]
    %v1144 = vld [vmem:[%s7 + $0x64] sm:$0xf]
    %v1145 = vld [vmem:[%s7 + $0x68] sm:$0xf]
    %v1146 = vld [vmem:[%s7 + $0x6c] sm:$0xf]
    %v1147 = vld [vmem:[%s7 + $0x70] sm:$0xf]
    %v1148 = vld [vmem:[%s7 + $0x74] sm:$0xf]
    %v1149 = vld [vmem:[%s7 + $0x78] sm:$0xf]
    %v1150 = vld [vmem:[%s7 + $0x7c] sm:$0xf]
    %v1151 = vld [vmem:[%s7 + $0x80] sm:$0xf]
    %v1152 = vld [vmem:[%s7 + $0x84] sm:$0xf]
    %v1153 = vld [vmem:[%s7 + $0x88] sm:$0xf]
    %v1154 = vld [vmem:[%s7 + $0x8c] sm:$0xf]
    %v1155 = vld [vmem:[%s7 + $0x90] sm:$0xf]
    %v1156 = vld [vmem:[%s7 + $0x94] sm:$0xf]
    %v1157 = vld [vmem:[%s7 + $0x98] sm:$0xf]
    %v1158 = vld [vmem:[%s7 + $0x9c] sm:$0xf]
    %v1159 = vld [vmem:[%s8] sm:$0x1]
    %v1161 = vlaneseq
    %v1162 = vshrl.u32 %v1161, 7
    %v1163 = vsub.s32 0, %v1162
    %v1164 = vrot.slane %v1159, %v1163
    %v1206 = vunpack.c.l.b16 %v1119
    %v1207 = vunpack.c.l.b16 %v1120
    %v1208 = vunpack.c.l.b16 %v1121
    %v1209 = vunpack.c.l.b16 %v1122
    %v1210 = vunpack.c.l.b16 %v1123
    %v1211 = vunpack.c.l.b16 %v1124
    %v1212 = vunpack.c.l.b16 %v1125
    %v1213 = vunpack.c.l.b16 %v1126
    %v1214 = vunpack.c.l.b16 %v1127
    %v1215 = vunpack.c.l.b16 %v1128
    %v1216 = vunpack.c.l.b16 %v1129
    %v1217 = vunpack.c.l.b16 %v1130
    %v1218 = vunpack.c.l.b16 %v1131
    %v1219 = vunpack.c.l.b16 %v1132
    %v1220 = vunpack.c.l.b16 %v1133
    %v1221 = vunpack.c.l.b16 %v1134
    %v1222 = vunpack.c.l.b16 %v1135
    %v1223 = vunpack.c.l.b16 %v1136
    %v1224 = vunpack.c.l.b16 %v1137
    %v1225 = vunpack.c.l.b16 %v1138
    %v1226 = vunpack.c.l.b16 %v1139
    %v1227 = vunpack.c.l.b16 %v1140
    %v1228 = vunpack.c.l.b16 %v1141
    %v1229 = vunpack.c.l.b16 %v1142
    %v1230 = vunpack.c.l.b16 %v1143
    %v1231 = vunpack.c.l.b16 %v1144
    %v1232 = vunpack.c.l.b16 %v1145
    %v1233 = vunpack.c.l.b16 %v1146
    %v1234 = vunpack.c.l.b16 %v1147
    %v1235 = vunpack.c.l.b16 %v1148
    %v1236 = vunpack.c.l.b16 %v1149
    %v1237 = vunpack.c.l.b16 %v1150
    %v1238 = vunpack.c.l.b16 %v1151
    %v1239 = vunpack.c.l.b16 %v1152
    %v1240 = vunpack.c.l.b16 %v1153
    %v1241 = vunpack.c.l.b16 %v1154
    %v1242 = vunpack.c.l.b16 %v1155
    %v1243 = vunpack.c.l.b16 %v1156
    %v1244 = vunpack.c.l.b16 %v1157
    %v1245 = vunpack.c.l.b16 %v1158
    %v1246 = vpack.c.b16 %v1207, %v1206
    %v1247 = vpack.c.b16 %v1209, %v1208
    %v1248 = vpack.c.b16 %v1211, %v1210
    %v1249 = vpack.c.b16 %v1213, %v1212
    %v1250 = vpack.c.b16 %v1215, %v1214
    %v1251 = vpack.c.b16 %v1217, %v1216
    %v1252 = vpack.c.b16 %v1219, %v1218
    %v1253 = vpack.c.b16 %v1221, %v1220
    %v1254 = vpack.c.b16 %v1223, %v1222
    %v1255 = vpack.c.b16 %v1225, %v1224
    %v1256 = vpack.c.b16 %v1227, %v1226
    %v1257 = vpack.c.b16 %v1229, %v1228
    %v1258 = vpack.c.b16 %v1231, %v1230
    %v1259 = vpack.c.b16 %v1233, %v1232
    %v1260 = vpack.c.b16 %v1235, %v1234
    %v1261 = vpack.c.b16 %v1237, %v1236
    %v1262 = vpack.c.b16 %v1239, %v1238
    %v1263 = vpack.c.b16 %v1241, %v1240
    %v1264 = vpack.c.b16 %v1243, %v1242
    %v1265 = vpack.c.b16 %v1245, %v1244
    %vm1286 = vcmask 523264
    %v1288 = vsel %vm1286, %v1118, 0
    %1290 = vmatprep.subr.bf16.mxu0 0
    %1291 = vmatpush1.bf16.msra.mxu0 %v1246
    %1292 = vmatprep.subr.bf16.mxu0 0
    %1293 = vmatpush1.bf16.msra.mxu0 %v1247
    %1294 = vmatprep.subr.bf16.mxu0 0
    %1295 = vmatpush1.bf16.msra.mxu0 %v1248
    %1296 = vmatprep.subr.bf16.mxu0 0
    %1297 = vmatpush1.bf16.msra.mxu0 %v1249
    %1298 = vmatprep.subr.bf16.mxu0 0
    %1299 = vmatpush1.bf16.msra.mxu0 %v1250
    %1300 = vmatprep.subr.bf16.mxu0 0
    %1301 = vmatpush1.bf16.msra.mxu0 %v1251
    %1302 = vmatprep.subr.bf16.mxu0 0
    %1303 = vmatpush1.bf16.msra.mxu0 %v1252
    %1304 = vmatprep.subr.bf16.mxu0 0
    %1305 = vmatpush1.bf16.msra.mxu0 %v1253
    %1306 = vmatprep.subr.bf16.mxu0 0
    %1307 = vmatpush1.bf16.msra.mxu0 %v1254
    %1308 = vmatprep.subr.bf16.mxu0 0
    %1309 = vmatpush1.bf16.msra.mxu0 %v1255
    %1310 = vmatprep.subr.bf16.mxu0 0
    %1311 = vmatpush1.bf16.msra.mxu0 %v1256
    %1312 = vmatprep.subr.bf16.mxu0 0
    %1313 = vmatpush1.bf16.msra.mxu0 %v1257
    %1314 = vmatprep.subr.bf16.mxu0 0
    %1315 = vmatpush1.bf16.msra.mxu0 %v1258
    %1316 = vmatprep.subr.bf16.mxu0 0
    %1317 = vmatpush1.bf16.msra.mxu0 %v1259
    %1318 = vmatprep.subr.bf16.mxu0 0
    %1319 = vmatpush1.bf16.msra.mxu0 %v1260
    %1320 = vmatprep.subr.bf16.mxu0 0
    %1321 = vmatpush1.bf16.msra.mxu0 %v1261
    %1322 = vmatprep.mubr.bf16.mxu0 %v1117
    %1323 = vmatmul.mubr.bf16.gmra.mrb[0].mxu0 %v1116
    %v1324 = vpop.f32.mrb[0].mxu0
    %v1325 = vadd.f32 %v1164, %v1324
    %v1326 = vpop.f32.mrb[0].mxu0
    %v1327 = vpop.f32.mrb[0].mxu0
    %v1328 = vpop.f32.mrb[0].mxu0
    %1329 = vdwg.mxu0
    %1330 = vmatprep.subr.bf16.mxu0 0
    %1331 = vmatpush1.bf16.msra.mxu0 %v1262
    %1332 = vmatprep.subr.bf16.mxu0 0
    %1333 = vmatpush1.bf16.msra.mxu0 %v1263
    %1334 = vmatprep.subr.bf16.mxu0 0
    %1335 = vmatpush1.bf16.msra.mxu0 %v1264
    %1336 = vmatprep.subr.bf16.mxu0 0
    %1337 = vmatpush1.bf16.msra.mxu0 %v1265
    %1338 = vmatprep.subr.bf16.mxu0 0
    %1339 = vmatpush1.bf16.msra.mxu0 0
    %1340 = vmatprep.subr.bf16.mxu0 0
    %1341 = vmatpush1.bf16.msra.mxu0 0
    %1342 = vmatprep.subr.bf16.mxu0 0
    %1343 = vmatpush1.bf16.msra.mxu0 0
    %1344 = vmatprep.subr.bf16.mxu0 0
    %1345 = vmatpush1.bf16.msra.mxu0 0
    %1346 = vmatprep.subr.bf16.mxu0 0
    %1347 = vmatpush1.bf16.msra.mxu0 0
    %1348 = vmatprep.subr.bf16.mxu0 0
    %1349 = vmatpush1.bf16.msra.mxu0 0
    %1350 = vmatprep.subr.bf16.mxu0 0
    %1351 = vmatpush1.bf16.msra.mxu0 0
    %1352 = vmatprep.subr.bf16.mxu0 0
    %1353 = vmatpush1.bf16.msra.mxu0 0
    %1354 = vmatprep.subr.bf16.mxu0 0
    %1355 = vmatpush1.bf16.msra.mxu0 0
    %1356 = vmatprep.subr.bf16.mxu0 0
    %1357 = vmatpush1.bf16.msra.mxu0 0
    %1358 = vmatprep.subr.bf16.mxu0 0
    %1359 = vmatpush1.bf16.msra.mxu0 0
    %1360 = vmatprep.subr.bf16.mxu0 0
    %1361 = vmatpush1.bf16.msra.mxu0 0
    %1362 = vmatprep.mubr.bf16.mxu0 0
    %1363 = vmatmul.mubr.bf16.gmra.mrb[0].mxu0 %v1288
    %v1364 = vpop.f32.mrb[0].mxu0
    %v1365 = vadd.f32 %v1325, %v1364
    %v1366 = vpop.f32.mrb[0].mxu0
    %v1367 = vpop.f32.mrb[0].mxu0
    %v1368 = vpop.f32.mrb[0].mxu0
    %1369 = vdwg.mxu0
    %v1370 = vmax.f32 %v1365, 0.0
    %1371 = vst [vmem:[#allocation5] sm:$0xff] %v1370
    // Predicated region
    $region42: #{tpu_custom_call.1} parent=1 // pred_check
      _
    $region43: #{tpu_custom_call.1} parent=1 // pred_check_branch
      %1373 = sbr.rel (0) target = $region45
    $region44: #{tpu_custom_call.1} parent=1 // pred_region
      %s1375 = ssub.s32 128, 128
      %1376 = vsyncadd [#allocation4], %s1375
      %s1378 = sshll.u32 [#allocation5], 4
      %s1379 = int_to_ptr.vmem [resolvable:$true] %s1378
      %1381 = dma.vmem_to_hbm [thread:$0]  %s1379, 128, %s9, [#allocation4]
    $region45: #{tpu_custom_call.1} parent=1 // pred_fallthru
      _
    // Predicated region
    $region46: #{tpu_custom_call.1} parent=1 // pred_check
      _
    $region47: #{tpu_custom_call.1} parent=1 // pred_check_branch
      %1383 = sbr.rel (0) target = $region49
    $region48: #{tpu_custom_call.1} parent=1 // pred_region
      %1384 = dma.done [#allocation4], 128
    $region49: #{tpu_custom_call.1} parent=1 // pred_fallthru
      _
    %1385 = vsyncpa [#allocation3], 1
    %1386 = vsyncpa [#allocation4], 1

</llo_original>
